<compile_context>
chip_gen: v7x
topology: tpu7x:2x2x1
jax: 0.10.0
libtpu: 0.0.40
codegen_flags: <defaults>
</compile_context>

<pallas_src>
import jax
import jax.numpy as jnp
from jax.experimental import pallas as pl
from jax.experimental.pallas import tpu as pltpu


# ---------------------------------------------------------------------------
# helpers
# ---------------------------------------------------------------------------
_SUBLANE = 8    # sublane count of a vreg (second-to-last dim granularity)


def _round_up(x, m):
    return ((x + m - 1) // m) * m


def _choose_tile_b(batch):
    """Batch tile selection.

    * batch <= 512: one block whose size equals the full batch (legal even if
      not a multiple of 8, since block dim == full array dim); per-step work
      below this is too small to be worth splitting.
    * batch  > 512: >=2 grid steps so v7x can shard the batch over both
      TensorCores (no-op on single-TC v5e/v6e), capped at 1024 rows/step to
      amortize the ~0.35us/step grid overhead. The final block may be ragged;
      Pallas masks the out-of-bounds rows on store.
    """
    cap = 1024
    if batch <= 512:
        return batch
    return min(_round_up(pl.cdiv(batch, 2), _SUBLANE), cap)


# ---------------------------------------------------------------------------
# kernel
# ---------------------------------------------------------------------------
def _mlp_kernel(x_ref, w1_ref, b1_ref, w2_ref, b2_ref, o_ref):
    # fc1: MXU matmul with f32 accumulation, bias + ReLU on the f32
    # accumulator (single VALU op per element, no intermediate casts).
    h = jnp.dot(x_ref[...], w1_ref[...], preferred_element_type=jnp.float32)
    h = jnp.maximum(h + b1_ref[...], 0.0)          # (TB, H) + (1, H)
    # fc2: second MXU matmul, still f32 end-to-end.
    y = jnp.dot(h, w2_ref[...], preferred_element_type=jnp.float32)
    o_ref[...] = (y + b2_ref[...]).astype(o_ref.dtype)   # (TB, A) store


# ---------------------------------------------------------------------------
# parameter init (mirrors torch.nn.Linear defaults, unpadded)
# ---------------------------------------------------------------------------
def init_params(key, state_dim, hidden_dim, action_dim, dtype=jnp.float32):
    """U(-1/sqrt(fan_in), 1/sqrt(fan_in)) for both weight and bias."""
    k1, k2, k3, k4 = jax.random.split(key, 4)
    bound1 = 1.0 / (state_dim ** 0.5)
    bound2 = 1.0 / (hidden_dim ** 0.5)
    w1 = jax.random.uniform(k1, (state_dim, hidden_dim), dtype, -bound1, bound1)
    b1 = jax.random.uniform(k2, (hidden_dim,), dtype, -bound1, bound1)
    w2 = jax.random.uniform(k3, (hidden_dim, action_dim), dtype, -bound2, bound2)
    b2 = jax.random.uniform(k4, (action_dim,), dtype, -bound2, bound2)
    return w1, b1, w2, b2


# ---------------------------------------------------------------------------
# forward
# ---------------------------------------------------------------------------
def mlp_forward(x, w1, b1, w2, b2):
    """x: (B, state_dim) f32; w1: (state_dim, H); b1: (H,); w2: (H, A); b2: (A,).
       Returns (B, A) == fc2(relu(fc1(x)))."""
    B, K = x.shape
    H = w1.shape[1]
    A = w2.shape[1]
    b1 = b1.reshape(1, H)   # 2-D biases for clean (sublane, lane) layout
    b2 = b2.reshape(1, A)

    tile_b = _choose_tile_b(B)
    grid = (pl.cdiv(B, tile_b),)

    # True (unpadded) cost for XLA's scheduler.
    flops = 2 * B * (K * H + H * A)
    bytes_accessed = 4 * (B * K + K * H + H + H * A + A + B * A)

    return pl.pallas_call(
        _mlp_kernel,
        out_shape=jax.ShapeDtypeStruct((B, A), x.dtype),
        grid_spec=pltpu.PrefetchScalarGridSpec(
            num_scalar_prefetch=0,
            grid=grid,
            in_specs=[
                # x: one (tile_b, K) block per grid step -> streamed.
                # Last dim K equals the full array dim, so no 128-lane pad.
                pl.BlockSpec((tile_b, K), lambda i: (i, 0)),
                # weights / biases: same block every step -> VMEM-resident.
                pl.BlockSpec((K, H), lambda i: (0, 0)),
                pl.BlockSpec((1, H), lambda i: (0, 0)),
                pl.BlockSpec((H, A), lambda i: (0, 0)),
                pl.BlockSpec((1, A), lambda i: (0, 0)),
            ],
            # Output kept at true width A (tiny HBM write, ragged final block
            # masked automatically) -> no post-call slice needed.
            out_specs=pl.BlockSpec((tile_b, A), lambda i: (i, 0)),
        ),
        compiler_params=pltpu.CompilerParams(
            # batch axis is embarrassingly parallel -> v7x shards it over its
            # 2 TensorCores; harmless no-op on single-TC v5e/v6e.
            dimension_semantics=("parallel",),
        ),
        cost_estimate=pl.CostEstimate(
            flops=flops, transcendentals=0, bytes_accessed=bytes_accessed),
    )(x, w1, b1, w2, b2)


# ---------------------------------------------------------------------------
# demo / correctness check
# ---------------------------------------------------------------------------
if __name__ == "__main__":
    key = jax.random.PRNGKey(0)
    batch, state_dim, hidden_dim, action_dim = 2, 4, 32, 6

    kx, kp = jax.random.split(key)
    x = jax.random.normal(kx, (batch, state_dim), dtype=jnp.float32)
    w1, b1, w2, b2 = init_params(kp, state_dim, hidden_dim, action_dim)

    fwd = jax.jit(mlp_forward)
    out = jax.block_until_ready(fwd(x, w1, b1, w2, b2))

    # reference check in plain JAX
    ref = jnp.maximum(x @ w1 + b1, 0.0) @ w2 + b2
    assert out.shape == (batch, action_dim)
    assert jnp.allclose(out, ref, atol=1e-5, rtol=1e-5)

    # larger, non-aligned batch: exercises the >=2-step grid path and the
    # masked ragged final block (1037 rows -> 2 blocks of 520, 3 rows masked).
    big_x = jax.random.normal(jax.random.PRNGKey(1), (1037, state_dim),
                              dtype=jnp.float32)
    big_out = jax.block_until_ready(fwd(big_x, w1, b1, w2, b2))
    big_ref = jnp.maximum(big_x @ w1 + b1, 0.0) @ w2 + b2
    assert big_out.shape == (1037, action_dim)
    assert jnp.allclose(big_out, big_ref, atol=1e-4, rtol=1e-4)

    print("KERNEL_OK")
</pallas_src>

<mosaic_0001>
module attributes {stable_mosaic.version = 11 : i64} {
  func.func @_mlp_kernel(%arg0: i32, %arg1: memref<2x4xf32, #tpu.memory_space<vmem>>, %arg2: memref<4x32xf32, #tpu.memory_space<vmem>>, %arg3: memref<1x32xf32, #tpu.memory_space<vmem>>, %arg4: memref<32x6xf32, #tpu.memory_space<vmem>>, %arg5: memref<1x6xf32, #tpu.memory_space<vmem>>, %arg6: memref<2x6xf32, #tpu.memory_space<vmem>>) attributes {dimension_semantics = [#tpu.dimension_semantics<parallel>], iteration_bounds = array<i64: 1>, scalar_prefetch = 0 : i64, scratch_operands = 0 : i64, tpu.core_type = #tpu.core_type<tc>, window_params = [{transform_indices = @transform_0, window_bounds = array<i64: 2, 4>}, {pipeline_mode = #tpu.pipeline_mode<synchronous>, transform_indices = @transform_1, window_bounds = array<i64: 4, 32>}, {pipeline_mode = #tpu.pipeline_mode<synchronous>, transform_indices = @transform_2, window_bounds = array<i64: 1, 32>}, {pipeline_mode = #tpu.pipeline_mode<synchronous>, transform_indices = @transform_3, window_bounds = array<i64: 32, 6>}, {pipeline_mode = #tpu.pipeline_mode<synchronous>, transform_indices = @transform_4, window_bounds = array<i64: 1, 6>}, {transform_indices = @transform_5, window_bounds = array<i64: 2, 6>}]} {
    %c0 = arith.constant 0 : index
    %c0_0 = arith.constant 0 : index
    %0 = vector.load %arg1[%c0, %c0_0] : memref<2x4xf32, #tpu.memory_space<vmem>>, vector<2x4xf32>
    %c0_1 = arith.constant 0 : index
    %c0_2 = arith.constant 0 : index
    %1 = vector.load %arg2[%c0_1, %c0_2] : memref<4x32xf32, #tpu.memory_space<vmem>>, vector<4x32xf32>
    %cst = arith.constant dense<0.000000e+00> : vector<2x32xf32>
    %2 = tpu.matmul %0, %1, %cst {dimension_numbers = #tpu.dot_dimension_numbers<[1], [0], [0], [1], [0, 0, 1, 1], [], []>} : vector<2x4xf32>, vector<4x32xf32>, vector<2x32xf32> -> vector<2x32xf32>
    %c0_3 = arith.constant 0 : index
    %c0_4 = arith.constant 0 : index
    %3 = vector.load %arg3[%c0_3, %c0_4] : memref<1x32xf32, #tpu.memory_space<vmem>>, vector<1x32xf32>
    %4 = vector.broadcast %3 : vector<1x32xf32> to vector<2x32xf32>
    %5 = arith.addf %2, %4 : vector<2x32xf32>
    %cst_5 = arith.constant 0.000000e+00 : f32
    %6 = vector.broadcast %cst_5 : f32 to vector<2x32xf32>
    %7 = arith.maximumf %5, %6 : vector<2x32xf32>
    %c0_6 = arith.constant 0 : index
    %c0_7 = arith.constant 0 : index
    %8 = vector.load %arg4[%c0_6, %c0_7] : memref<32x6xf32, #tpu.memory_space<vmem>>, vector<32x6xf32>
    %cst_8 = arith.constant dense<0.000000e+00> : vector<2x6xf32>
    %9 = tpu.matmul %7, %8, %cst_8 {dimension_numbers = #tpu.dot_dimension_numbers<[1], [0], [0], [1], [0, 0, 1, 1], [], []>} : vector<2x32xf32>, vector<32x6xf32>, vector<2x6xf32> -> vector<2x6xf32>
    %c0_9 = arith.constant 0 : index
    %c0_10 = arith.constant 0 : index
    %10 = vector.load %arg5[%c0_9, %c0_10] : memref<1x6xf32, #tpu.memory_space<vmem>>, vector<1x6xf32>
    %11 = vector.broadcast %10 : vector<1x6xf32> to vector<2x6xf32>
    %12 = arith.addf %9, %11 : vector<2x6xf32>
    %c0_11 = arith.constant 0 : index
    %c0_12 = arith.constant 0 : index
    %13 = vector.load %arg6[%c0_11, %c0_12] : memref<2x6xf32, #tpu.memory_space<vmem>>, vector<2x6xf32>
    tpu.vector_store %arg6[%c0_11, %c0_12], %12 {strides = array<i32>} : memref<2x6xf32, #tpu.memory_space<vmem>>, vector<2x6xf32>,
    return
  }
  func.func @transform_0(%arg0: i32) -> (i32, i32) {
    %c0_i32 = arith.constant 0 : i32
    %c0_i32_0 = arith.constant 0 : i32
    return %arg0, %c0_i32 : i32, i32
  }
  func.func @transform_1(%arg0: i32) -> (i32, i32) {
    %c0_i32 = arith.constant 0 : i32
    %c0_i32_0 = arith.constant 0 : i32
    %c0_i32_1 = arith.constant 0 : i32
    return %c0_i32, %c0_i32_0 : i32, i32
  }
  func.func @transform_2(%arg0: i32) -> (i32, i32) {
    %c0_i32 = arith.constant 0 : i32
    %c0_i32_0 = arith.constant 0 : i32
    %c0_i32_1 = arith.constant 0 : i32
    return %c0_i32, %c0_i32_0 : i32, i32
  }
  func.func @transform_3(%arg0: i32) -> (i32, i32) {
    %c0_i32 = arith.constant 0 : i32
    %c0_i32_0 = arith.constant 0 : i32
    %c0_i32_1 = arith.constant 0 : i32
    return %c0_i32, %c0_i32_0 : i32, i32
  }
  func.func @transform_4(%arg0: i32) -> (i32, i32) {
    %c0_i32 = arith.constant 0 : i32
    %c0_i32_0 = arith.constant 0 : i32
    %c0_i32_1 = arith.constant 0 : i32
    return %c0_i32, %c0_i32_0 : i32, i32
  }
  func.func @transform_5(%arg0: i32) -> (i32, i32) {
    %c0_i32 = arith.constant 0 : i32
    %c0_i32_0 = arith.constant 0 : i32
    return %arg0, %c0_i32 : i32, i32
  }
}

</mosaic_0001>

<llo_original>
// kernel: mlp_forward.1
$region0: #{mlp_forward.1}
  #allocation0 [shape = 'u32[]', space=smem, size = 0x4, offset = 0x4, fixed_abs, tag = 'smem constant byte address 0x4 - core index']
  #allocation1 [shape = 'u32[144,128]{1,0:T(1,128)}', space=vmem, size = 0x12000, scoped, tag = 'internal scratch']
  %s0 = inlined_call_operand.vmem [shape: f32[2,4], index: 0, kind: input, shape index: {}]
  %s1 = inlined_call_operand.vmem [shape: f32[4,32], index: 1, kind: input, shape index: {}]
  %s2 = inlined_call_operand.vmem [shape: f32[1,32], index: 2, kind: input, shape index: {}]
  %s3 = inlined_call_operand.vmem [shape: f32[32,6], index: 3, kind: input, shape index: {}]
  %s4 = inlined_call_operand.vmem [shape: f32[1,6], index: 4, kind: input, shape index: {}]
  %s5 = inlined_call_operand.hbm [shape: f32[2,6], index: 5, kind: output, shape index: {}]
  %s6 = sld [smem:[#allocation0]]
  $region30: #{mlp_forward.1} parent=0
    _
  %s8 = ssub.s32 1, %s6
  %s9 = scalar_select 0, %s8, %s6
  $region1: #{mlp_forward.1} parent=0
    #allocation2 [shape = 'u8[1024]{0}', space=vmem, size = 0x400, scoped, tag = 'output window, operand 0, single buffered']
    #allocation3 [shape = 's32[1]{0}', space=sflag, size = 0x4, scoped, tag = 'scoped memory for mlp_forward.1']
    %10 = vsyncpa [#allocation3], 0
    // Predicated region
    $region2: #{mlp_forward.1} parent=1 // pred_check
      _
    $region3: #{mlp_forward.1} parent=1 // pred_check_branch
      %12 = sbr.rel (0) target = $region5
    $region4: #{mlp_forward.1} parent=1 // pred_region
      _
    $region5: #{mlp_forward.1} parent=1 // pred_fallthru
      _
    // Predicated region
    $region6: #{mlp_forward.1} parent=1 // pred_check
      _
    $region7: #{mlp_forward.1} parent=1 // pred_check_branch
      %14 = sbr.rel (0) target = $region9
    $region8: #{mlp_forward.1} parent=1 // pred_region
      _
    $region9: #{mlp_forward.1} parent=1 // pred_fallthru
      _
    // Predicated region
    $region10: #{mlp_forward.1} parent=1 // pred_check
      _
    $region11: #{mlp_forward.1} parent=1 // pred_check_branch
      %16 = sbr.rel (0) target = $region13
    $region12: #{mlp_forward.1} parent=1 // pred_region
      _
    $region13: #{mlp_forward.1} parent=1 // pred_fallthru
      _
    // Predicated region
    $region14: #{mlp_forward.1} parent=1 // pred_check
      _
    $region15: #{mlp_forward.1} parent=1 // pred_check_branch
      %18 = sbr.rel (0) target = $region17
    $region16: #{mlp_forward.1} parent=1 // pred_region
      _
    $region17: #{mlp_forward.1} parent=1 // pred_fallthru
      _
    // Predicated region
    $region18: #{mlp_forward.1} parent=1 // pred_check
      _
    $region19: #{mlp_forward.1} parent=1 // pred_check_branch
      %20 = sbr.rel (0) target = $region21
    $region20: #{mlp_forward.1} parent=1 // pred_region
      _
    $region21: #{mlp_forward.1} parent=1 // pred_fallthru
      _
    %v21 = vld [vmem:[%s0] sm:$0x3]
    %v22 = vld [vmem:[%s1] sm:$0xf]
    %v23 = vld [vmem:[%s2] sm:$0x1]
    %v25 = vlaneseq
    %v26 = vshrl.u32 %v25, 7
    %v27 = vsub.s32 0, %v26
    %v28 = vrot.slane %v23, %v27
    %vm30 = vcmask 31744
    %v32 = vsel %vm30, %v21, 0
    %vm34 = vcmask 1043456
    %v36 = vsel %vm34, %v22, 0
    %38 = vmatprep.subr.mxu0 0.0
    %39 = vmatpush1.msra.mxu0 %v36
    %40 = vmatprep.subr.mxu0 0.0
    %41 = vmatpush1.msra.mxu0 0.0
    %42 = vmatprep.subr.mxu0 0.0
    %43 = vmatpush1.msra.mxu0 0.0
    %44 = vmatprep.subr.mxu0 0.0
    %45 = vmatpush1.msra.mxu0 0.0
    %46 = vmatprep.subr.mxu0 0.0
    %47 = vmatpush1.msra.mxu0 0.0
    %48 = vmatprep.subr.mxu0 0.0
    %49 = vmatpush1.msra.mxu0 0.0
    %50 = vmatprep.subr.mxu0 0.0
    %51 = vmatpush1.msra.mxu0 0.0
    %52 = vmatprep.subr.mxu0 0.0
    %53 = vmatpush1.msra.mxu0 0.0
    %54 = vmatprep.subr.mxu0 0.0
    %55 = vmatpush1.msra.mxu0 0.0
    %56 = vmatprep.subr.mxu0 0.0
    %57 = vmatpush1.msra.mxu0 0.0
    %58 = vmatprep.subr.mxu0 0.0
    %59 = vmatpush1.msra.mxu0 0.0
    %60 = vmatprep.subr.mxu0 0.0
    %61 = vmatpush1.msra.mxu0 0.0
    %62 = vmatprep.subr.mxu0 0.0
    %63 = vmatpush1.msra.mxu0 0.0
    %64 = vmatprep.subr.mxu0 0.0
    %65 = vmatpush1.msra.mxu0 0.0
    %66 = vmatprep.subr.mxu0 0.0
    %67 = vmatpush1.msra.mxu0 0.0
    %68 = vmatprep.subr.mxu0 0.0
    %69 = vmatpush1.msra.mxu0 0.0
    %70 = vmatprep.subr.mxu0 0.0
    %71 = vmatpush1.msra.mxu0 0.0
    %72 = vmatprep.subr.mxu0 0.0
    %73 = vmatpush1.msra.mxu0 0.0
    %74 = vmatprep.subr.mxu0 0.0
    %75 = vmatpush1.msra.mxu0 0.0
    %76 = vmatprep.subr.mxu0 0.0
    %77 = vmatpush1.msra.mxu0 0.0
    %78 = vmatprep.subr.mxu0 0.0
    %79 = vmatpush1.msra.mxu0 0.0
    %80 = vmatprep.subr.mxu0 0.0
    %81 = vmatpush1.msra.mxu0 0.0
    %82 = vmatprep.subr.mxu0 0.0
    %83 = vmatpush1.msra.mxu0 0.0
    %84 = vmatprep.subr.mxu0 0.0
    %85 = vmatpush1.msra.mxu0 0.0
    %86 = vmatprep.subr.mxu0 0.0
    %87 = vmatpush1.msra.mxu0 0.0
    %88 = vmatprep.subr.mxu0 0.0
    %89 = vmatpush1.msra.mxu0 0.0
    %90 = vmatprep.subr.mxu0 0.0
    %91 = vmatpush1.msra.mxu0 0.0
    %92 = vmatprep.subr.mxu0 0.0
    %93 = vmatpush1.msra.mxu0 0.0
    %94 = vmatprep.subr.mxu0 0.0
    %95 = vmatpush1.msra.mxu0 0.0
    %96 = vmatprep.subr.mxu0 0.0
    %97 = vmatpush1.msra.mxu0 0.0
    %98 = vmatprep.subr.mxu0 0.0
    %99 = vmatpush1.msra.mxu0 0.0
    %100 = vmatprep.subr.mxu0 0.0
    %101 = vmatpush1.msra.mxu0 0.0
    %102 = vmatprep.mubr.f32.mxu0 0.0
    %103 = vmatmul.mubr.f32.gmra.mrb[0].mxu0 %v32
    %v104 = vpop.f32.mrb[0].mxu0
    %v105 = vadd.f32 %v28, %v104
    %v106 = vpop.f32.mrb[0].mxu0
    %107 = vdwg.mxu0
    %v108 = vmax.f32 %v105, 0.0
    %v109 = vld [vmem:[%s3] sm:$0xff]
    %v110 = vld [vmem:[%s3 + $0x8] sm:$0xff]
    %v111 = vld [vmem:[%s3 + $0x10] sm:$0xff]
    %v112 = vld [vmem:[%s3 + $0x18] sm:$0xff]
    %v113 = vld [vmem:[%s4] sm:$0x1]
    %v115 = vlaneseq
    %v116 = vshrl.u32 %v115, 7
    %v117 = vsub.s32 0, %v116
    %v118 = vrot.slane %v113, %v117
    %vm120 = vcmask 261120
    %v122 = vsel %vm120, %v108, 0
    %124 = vmatprep.subr.mxu0 0.0
    %125 = vmatpush1.msra.mxu0 %v109
    %126 = vmatprep.subr.mxu0 0.0
    %127 = vmatpush1.msra.mxu0 %v110
    %128 = vmatprep.subr.mxu0 0.0
    %129 = vmatpush1.msra.mxu0 %v111
    %130 = vmatprep.subr.mxu0 0.0
    %131 = vmatpush1.msra.mxu0 %v112
    %132 = vmatprep.subr.mxu0 0.0
    %133 = vmatpush1.msra.mxu0 0.0
    %134 = vmatprep.subr.mxu0 0.0
    %135 = vmatpush1.msra.mxu0 0.0
    %136 = vmatprep.subr.mxu0 0.0
    %137 = vmatpush1.msra.mxu0 0.0
    %138 = vmatprep.subr.mxu0 0.0
    %139 = vmatpush1.msra.mxu0 0.0
    %140 = vmatprep.subr.mxu0 0.0
    %141 = vmatpush1.msra.mxu0 0.0
    %142 = vmatprep.subr.mxu0 0.0
    %143 = vmatpush1.msra.mxu0 0.0
    %144 = vmatprep.subr.mxu0 0.0
    %145 = vmatpush1.msra.mxu0 0.0
    %146 = vmatprep.subr.mxu0 0.0
    %147 = vmatpush1.msra.mxu0 0.0
    %148 = vmatprep.subr.mxu0 0.0
    %149 = vmatpush1.msra.mxu0 0.0
    %150 = vmatprep.subr.mxu0 0.0
    %151 = vmatpush1.msra.mxu0 0.0
    %152 = vmatprep.subr.mxu0 0.0
    %153 = vmatpush1.msra.mxu0 0.0
    %154 = vmatprep.subr.mxu0 0.0
    %155 = vmatpush1.msra.mxu0 0.0
    %156 = vmatprep.subr.mxu0 0.0
    %157 = vmatpush1.msra.mxu0 0.0
    %158 = vmatprep.subr.mxu0 0.0
    %159 = vmatpush1.msra.mxu0 0.0
    %160 = vmatprep.subr.mxu0 0.0
    %161 = vmatpush1.msra.mxu0 0.0
    %162 = vmatprep.subr.mxu0 0.0
    %163 = vmatpush1.msra.mxu0 0.0
    %164 = vmatprep.subr.mxu0 0.0
    %165 = vmatpush1.msra.mxu0 0.0
    %166 = vmatprep.subr.mxu0 0.0
    %167 = vmatpush1.msra.mxu0 0.0
    %168 = vmatprep.subr.mxu0 0.0
    %169 = vmatpush1.msra.mxu0 0.0
    %170 = vmatprep.subr.mxu0 0.0
    %171 = vmatpush1.msra.mxu0 0.0
    %172 = vmatprep.subr.mxu0 0.0
    %173 = vmatpush1.msra.mxu0 0.0
    %174 = vmatprep.subr.mxu0 0.0
    %175 = vmatpush1.msra.mxu0 0.0
    %176 = vmatprep.subr.mxu0 0.0
    %177 = vmatpush1.msra.mxu0 0.0
    %178 = vmatprep.subr.mxu0 0.0
    %179 = vmatpush1.msra.mxu0 0.0
    %180 = vmatprep.subr.mxu0 0.0
    %181 = vmatpush1.msra.mxu0 0.0
    %182 = vmatprep.subr.mxu0 0.0
    %183 = vmatpush1.msra.mxu0 0.0
    %184 = vmatprep.subr.mxu0 0.0
    %185 = vmatpush1.msra.mxu0 0.0
    %186 = vmatprep.subr.mxu0 0.0
    %187 = vmatpush1.msra.mxu0 0.0
    %188 = vmatprep.mubr.f32.mxu0 0.0
    %189 = vmatmul.mubr.f32.gmra.mrb[0].mxu0 %v122
    %v190 = vpop.f32.mrb[0].mxu0
    %v191 = vadd.f32 %v118, %v190
    %v192 = vpop.f32.mrb[0].mxu0
    %193 = vdwg.mxu0
    %vm194 = vcmask 41984
    %195 = vst.msk [vmem:[#allocation2] sm:$0x3] %vm194, %v191
    // Predicated region
    $region22: #{mlp_forward.1} parent=1 // pred_check
      _
    $region23: #{mlp_forward.1} parent=1 // pred_check_branch
      %197 = sbr.rel (0) target = $region25
    $region24: #{mlp_forward.1} parent=1 // pred_region
      %s199 = ssub.s32 32, 32
      %200 = vsyncadd [#allocation3], %s199
      %s202 = sshll.u32 [#allocation2], 4
      %s203 = int_to_ptr.vmem [resolvable:$true] %s202
      %205 = dma.vmem_to_hbm [thread:$0]  %s203, 32, %s5, [#allocation3]
    $region25: #{mlp_forward.1} parent=1 // pred_fallthru
      _
    // Predicated region
    $region26: #{mlp_forward.1} parent=1 // pred_check
      _
    $region27: #{mlp_forward.1} parent=1 // pred_check_branch
      %207 = sbr.rel (0) target = $region29
    $region28: #{mlp_forward.1} parent=1 // pred_region
      %208 = dma.done [#allocation3], 32
    $region29: #{mlp_forward.1} parent=1 // pred_fallthru
      _
    %209 = vsyncpa [#allocation3], 1

</llo_original>
